<compile_context>
chip_gen: v6e
topology: v6e:2x2x1
jax: 0.10.0
libtpu: 0.0.40
codegen_flags: <defaults>
</compile_context>

<pallas_src>
import functools

import jax
import jax.numpy as jnp
from jax import lax
from jax.experimental import pallas as pl
from jax.experimental.pallas import tpu as pltpu


def _round_up(x, m):
    return ((x + m - 1) // m) * m


# -----------------------------------------------------------------------------
# Fused Pallas kernel: encoder matmul + grouped hidden layer + predictor heads
# -----------------------------------------------------------------------------
def fused_probe_kernel(x_ref, we_t_ref, w1_ref, b1_ref, w2_ref, b2_ref, out_ref):
    # encoder: feat = x_flat @ W_enc   (bias folded into b1'), contract Din of
    # both operands -> (TB, L); w_enc is stored transposed (L, Din) lane-dense.
    xb = x_ref[...].astype(jnp.bfloat16)
    feat = lax.dot_general(
        xb, we_t_ref[...],
        dimension_numbers=(((1,), (1,)), ((), ())),
        preferred_element_type=jnp.float32,
    )
    # grouped 1x1 Conv1d == per-factor Linear; all factors fused in one wide
    # matmul: h = relu(feat @ [W1_0^T | W1_1^T | ... | 0pad] + b1')
    #   (TB, L) @ (L, FH_pad) -> (TB, FH_pad); zero-padded columns stay 0.
    h = jnp.maximum(
        jnp.dot(feat.astype(jnp.bfloat16), w1_ref[...],
                preferred_element_type=jnp.float32) + b1_ref[...],
        0.0,
    )
    # predictor heads as one block-diagonal matmul (zero cross/pad blocks keep
    # it exactly equal to per-factor Linear + torch.cat):
    #   (TB, FH_pad) @ (FH_pad, OUT_pad) -> (TB, OUT_pad)
    out_ref[...] = (
        jnp.dot(h.astype(jnp.bfloat16), w2_ref[...],
                preferred_element_type=jnp.float32) + b2_ref[...]
    ).astype(out_ref.dtype)


# -----------------------------------------------------------------------------
# Wrapper
# -----------------------------------------------------------------------------
def fused_probe(x_flat, we_t, w1p, b1p, w2p, b2p, *, total_out, block_b=128):
    B, Din = x_flat.shape
    L = we_t.shape[0]
    FHp = w1p.shape[1]
    OUTp = w2p.shape[1]

    # Batch tile: sublane-aligned; >=128 only pays off for large batches.
    TB = min(block_b, _round_up(B, 8))
    B_pad = _round_up(B, TB)
    if B_pad != B:
        x_flat = jnp.pad(x_flat, ((0, B_pad - B), (0, 0)))
    grid = (B_pad // TB,)

    flops = 2 * B_pad * (Din * L + L * FHp + FHp * OUTp)
    bytes_accessed = (
        4 * x_flat.size + 2 * (we_t.size + w1p.size + w2p.size)
        + 4 * (b1p.size + b2p.size) + 4 * B_pad * OUTp
    )

    out = pl.pallas_call(
        fused_probe_kernel,
        out_shape=jax.ShapeDtypeStruct((B_pad, OUTp), jnp.float32),
        grid=grid,
        in_specs=[
            pl.BlockSpec((TB, Din), lambda i: (i, 0)),     # x tile (per step)
            pl.BlockSpec((L, Din), lambda i: (0, 0)),      # W_enc^T (resident)
            pl.BlockSpec((L, FHp), lambda i: (0, 0)),      # W1 concat (resident)
            pl.BlockSpec((1, FHp), lambda i: (0, 0)),      # b1' (resident)
            pl.BlockSpec((FHp, OUTp), lambda i: (0, 0)),   # W2 block-diag (resident)
            pl.BlockSpec((1, OUTp), lambda i: (0, 0)),     # b2 (resident)
        ],
        out_specs=pl.BlockSpec((TB, OUTp), lambda i: (i, 0)),
        compiler_params=pltpu.CompilerParams(
            dimension_semantics=("parallel",),   # batch axis -> v7x 2nd TC
        ),
        cost_estimate=pl.CostEstimate(
            flops=flops, transcendentals=0, bytes_accessed=bytes_accessed),
    )(x_flat, we_t, w1p, b1p, w2p, b2p)

    return out[:B, :total_out]


def probe_individual_forward(x_nchw, params, total_out):
    B = x_nchw.shape[0]
    x_flat = x_nchw.reshape(B, -1)   # same as torch .view(B, -1) on NCHW
    return fused_probe(
        x_flat,
        params["we_t"], params["w1p"], params["b1p"],
        params["w2p"], params["b2p"],
        total_out=total_out,
    )


# -----------------------------------------------------------------------------
# Offline parameter preparation (weights are frozen)
# -----------------------------------------------------------------------------
def prepare_params(w_enc, b_enc, w1_list, b1_list, w2_list, b2_list, out_sizes):
    num_factors = len(w1_list)
    L = w_enc.shape[1]
    H = w1_list[0].shape[1]
    FH = num_factors * H
    total_out = sum(out_sizes)
    FHp = max(128, _round_up(FH, 128))
    OUTp = max(128, _round_up(total_out, 128))

    # W1^T concatenated along output axis, zero-padded to lane-dense width.
    w1cat = jnp.concatenate(w1_list, axis=1)                     # (L, FH)
    b1cat = jnp.concatenate(b1_list, axis=1)                     # (1, FH)
    # Fold the (linear) encoder bias into the hidden bias: b1' = b_enc@W1 + b1.
    b1_fold = b_enc @ w1cat + b1cat                              # (1, FH) f32
    w1p = jnp.zeros((L, FHp), jnp.float32).at[:, :FH].set(w1cat)
    b1p = jnp.zeros((1, FHp), jnp.float32).at[:, :FH].set(b1_fold)

    # Block-diagonal predictor heads, zero-padded to lane-dense width.
    w2p = jnp.zeros((FHp, OUTp), jnp.float32)
    b2p = jnp.zeros((1, OUTp), jnp.float32)
    col = 0
    for i in range(num_factors):
        k = out_sizes[i]
        w2p = w2p.at[i * H:(i + 1) * H, col:col + k].set(w2_list[i])
        b2p = b2p.at[:, col:col + k].set(b2_list[i])
        col += k

    return {
        "we_t": w_enc.T.astype(jnp.bfloat16),      # (L, Din) lane-dense
        "w1p": w1p.astype(jnp.bfloat16),           # (L, FHp)
        "b1p": b1p,                                # (1, FHp) f32
        "w2p": w2p.astype(jnp.bfloat16),           # (FHp, OUTp)
        "b2p": b2p,                                # (1, OUTp) f32
    }, total_out


# -----------------------------------------------------------------------------
# Pure-JAX f32 reference (mirrors the PyTorch forward with per-factor weights)
# -----------------------------------------------------------------------------
def reference_forward(x_nchw, w_enc, b_enc, w1_list, b1_list, w2_list, b2_list):
    B = x_nchw.shape[0]
    xf = x_nchw.reshape(B, -1)
    feat = xf @ w_enc + b_enc[0]
    outs = []
    for f in range(len(w1_list)):
        # grouped 1x1 conv on tiled input == per-factor linear on the features
        h = jnp.maximum(feat @ w1_list[f] + b1_list[f][0], 0.0)
        outs.append(h @ w2_list[f] + b2_list[f][0])
    return jnp.concatenate(outs, axis=-1)   # torch.cat(all_preds, dim=-1)


# -----------------------------------------------------------------------------
# Main
# -----------------------------------------------------------------------------
if __name__ == "__main__":
    # Small configuration consistent with the PyTorch module.
    B, C, Himg, Wimg = 8, 4, 16, 16
    latent_dim = 32                     # model.latent_dim -> probe input_dim
    num_factors = 3
    hidden_dim = 32
    factor_sizes = [3, 4, 1]
    factor_discrete = [True, True, False]
    out_sizes = [s if d else 1 for s, d in zip(factor_sizes, factor_discrete)]

    Din = C * Himg * Wimg

    key = jax.random.PRNGKey(0)
    k_x, k_we, k_be, k_w1, k_b1, k_w2, k_b2 = jax.random.split(key, 7)

    x = jax.random.normal(k_x, (B, C, Himg, Wimg), dtype=jnp.float32)

    # TODO(synk): the original `model` is an arbitrary external frozen encoder;
    # a deterministic linear encoder with the same latent_dim is used here.
    w_enc = 0.05 * jax.random.normal(k_we, (Din, latent_dim), dtype=jnp.float32)
    b_enc = 0.05 * jax.random.normal(k_be, (1, latent_dim), dtype=jnp.float32)

    # Per-factor probe parameters (grouped Conv1d hidden layer + Linear heads).
    w1_keys = jax.random.split(k_w1, num_factors)
    b1_keys = jax.random.split(k_b1, num_factors)
    w2_keys = jax.random.split(k_w2, num_factors)
    b2_keys = jax.random.split(k_b2, num_factors)
    w1_list, b1_list, w2_list, b2_list = [], [], [], []
    for i in range(num_factors):
        w1_list.append(0.1 * jax.random.normal(
            w1_keys[i], (latent_dim, hidden_dim), dtype=jnp.float32))
        b1_list.append(0.1 * jax.random.normal(
            b1_keys[i], (1, hidden_dim), dtype=jnp.float32))
        w2_list.append(0.1 * jax.random.normal(
            w2_keys[i], (hidden_dim, out_sizes[i]), dtype=jnp.float32))
        b2_list.append(0.1 * jax.random.normal(
            b2_keys[i], (1, out_sizes[i]), dtype=jnp.float32))

    params, total_out = prepare_params(
        w_enc, b_enc, w1_list, b1_list, w2_list, b2_list, out_sizes)

    fwd = jax.jit(functools.partial(probe_individual_forward,
                                    total_out=total_out))
    out = fwd(x, params)
    out = jax.block_until_ready(out)

    ref = reference_forward(x, w_enc, b_enc, w1_list, b1_list, w2_list, b2_list)
    assert out.shape == (B, total_out), out.shape
    # bf16 weights / activations with f32 accumulation -> relaxed tolerance.
    assert jnp.allclose(out, ref, atol=3e-2, rtol=3e-2), (
        "mismatch vs f32 reference; max abs err = "
        f"{float(jnp.max(jnp.abs(out - ref)))}")

    print("KERNEL_OK")
</pallas_src>

<mosaic_0001>
module attributes {stable_mosaic.version = 11 : i64} {
  func.func @fused_probe_kernel(%arg0: i32, %arg1: memref<8x1024xf32, #tpu.memory_space<vmem>>, %arg2: memref<32x1024xbf16, #tpu.memory_space<vmem>>, %arg3: memref<32x128xbf16, #tpu.memory_space<vmem>>, %arg4: memref<1x128xf32, #tpu.memory_space<vmem>>, %arg5: memref<128x128xbf16, #tpu.memory_space<vmem>>, %arg6: memref<1x128xf32, #tpu.memory_space<vmem>>, %arg7: memref<8x128xf32, #tpu.memory_space<vmem>>) attributes {dimension_semantics = [#tpu.dimension_semantics<parallel>], iteration_bounds = array<i64: 1>, scalar_prefetch = 0 : i64, scratch_operands = 0 : i64, tpu.core_type = #tpu.core_type<tc>, window_params = [{transform_indices = @transform_0, window_bounds = array<i64: 8, 1024>}, {pipeline_mode = #tpu.pipeline_mode<synchronous>, transform_indices = @transform_1, window_bounds = array<i64: 32, 1024>}, {pipeline_mode = #tpu.pipeline_mode<synchronous>, transform_indices = @transform_2, window_bounds = array<i64: 32, 128>}, {pipeline_mode = #tpu.pipeline_mode<synchronous>, transform_indices = @transform_3, window_bounds = array<i64: 1, 128>}, {pipeline_mode = #tpu.pipeline_mode<synchronous>, transform_indices = @transform_4, window_bounds = array<i64: 128, 128>}, {pipeline_mode = #tpu.pipeline_mode<synchronous>, transform_indices = @transform_5, window_bounds = array<i64: 1, 128>}, {transform_indices = @transform_6, window_bounds = array<i64: 8, 128>}]} {
    %c0 = arith.constant 0 : index
    %c0_0 = arith.constant 0 : index
    %0 = vector.load %arg1[%c0, %c0_0] : memref<8x1024xf32, #tpu.memory_space<vmem>>, vector<8x1024xf32>
    %1 = arith.truncf %0 : vector<8x1024xf32> to vector<8x1024xbf16>
    %c0_1 = arith.constant 0 : index
    %c0_2 = arith.constant 0 : index
    %2 = vector.load %arg2[%c0_1, %c0_2] : memref<32x1024xbf16, #tpu.memory_space<vmem>>, vector<32x1024xbf16>
    %cst = arith.constant dense<0.000000e+00> : vector<8x32xf32>
    %3 = tpu.matmul %1, %2, %cst {dimension_numbers = #tpu.dot_dimension_numbers<[1], [1], [0], [0], [0, 0, 1, 0], [], []>} : vector<8x1024xbf16>, vector<32x1024xbf16>, vector<8x32xf32> -> vector<8x32xf32>
    %4 = arith.truncf %3 : vector<8x32xf32> to vector<8x32xbf16>
    %c0_3 = arith.constant 0 : index
    %c0_4 = arith.constant 0 : index
    %5 = vector.load %arg3[%c0_3, %c0_4] : memref<32x128xbf16, #tpu.memory_space<vmem>>, vector<32x128xbf16>
    %cst_5 = arith.constant dense<0.000000e+00> : vector<8x128xf32>
    %6 = tpu.matmul %4, %5, %cst_5 {dimension_numbers = #tpu.dot_dimension_numbers<[1], [0], [0], [1], [0, 0, 1, 1], [], []>} : vector<8x32xbf16>, vector<32x128xbf16>, vector<8x128xf32> -> vector<8x128xf32>
    %c0_6 = arith.constant 0 : index
    %c0_7 = arith.constant 0 : index
    %7 = vector.load %arg4[%c0_6, %c0_7] : memref<1x128xf32, #tpu.memory_space<vmem>>, vector<1x128xf32>
    %8 = vector.broadcast %7 : vector<1x128xf32> to vector<8x128xf32>
    %9 = arith.addf %6, %8 : vector<8x128xf32>
    %cst_8 = arith.constant 0.000000e+00 : f32
    %10 = vector.broadcast %cst_8 : f32 to vector<8x128xf32>
    %11 = arith.maximumf %9, %10 : vector<8x128xf32>
    %12 = arith.truncf %11 : vector<8x128xf32> to vector<8x128xbf16>
    %c0_9 = arith.constant 0 : index
    %c0_10 = arith.constant 0 : index
    %13 = vector.load %arg5[%c0_9, %c0_10] : memref<128x128xbf16, #tpu.memory_space<vmem>>, vector<128x128xbf16>
    %cst_11 = arith.constant dense<0.000000e+00> : vector<8x128xf32>
    %14 = tpu.matmul %12, %13, %cst_11 {dimension_numbers = #tpu.dot_dimension_numbers<[1], [0], [0], [1], [0, 0, 1, 1], [], []>} : vector<8x128xbf16>, vector<128x128xbf16>, vector<8x128xf32> -> vector<8x128xf32>
    %c0_12 = arith.constant 0 : index
    %c0_13 = arith.constant 0 : index
    %15 = vector.load %arg6[%c0_12, %c0_13] : memref<1x128xf32, #tpu.memory_space<vmem>>, vector<1x128xf32>
    %16 = vector.broadcast %15 : vector<1x128xf32> to vector<8x128xf32>
    %17 = arith.addf %14, %16 : vector<8x128xf32>
    %c0_14 = arith.constant 0 : index
    %c0_15 = arith.constant 0 : index
    %18 = vector.load %arg7[%c0_14, %c0_15] : memref<8x128xf32, #tpu.memory_space<vmem>>, vector<8x128xf32>
    tpu.vector_store %arg7[%c0_14, %c0_15], %17 {strides = array<i32>} : memref<8x128xf32, #tpu.memory_space<vmem>>, vector<8x128xf32>,
    return
  }
  func.func @transform_0(%arg0: i32) -> (i32, i32) {
    %c0_i32 = arith.constant 0 : i32
    %c0_i32_0 = arith.constant 0 : i32
    return %arg0, %c0_i32 : i32, i32
  }
  func.func @transform_1(%arg0: i32) -> (i32, i32) {
    %c0_i32 = arith.constant 0 : i32
    %c0_i32_0 = arith.constant 0 : i32
    %c0_i32_1 = arith.constant 0 : i32
    return %c0_i32, %c0_i32_0 : i32, i32
  }
  func.func @transform_2(%arg0: i32) -> (i32, i32) {
    %c0_i32 = arith.constant 0 : i32
    %c0_i32_0 = arith.constant 0 : i32
    %c0_i32_1 = arith.constant 0 : i32
    return %c0_i32, %c0_i32_0 : i32, i32
  }
  func.func @transform_3(%arg0: i32) -> (i32, i32) {
    %c0_i32 = arith.constant 0 : i32
    %c0_i32_0 = arith.constant 0 : i32
    %c0_i32_1 = arith.constant 0 : i32
    return %c0_i32, %c0_i32_0 : i32, i32
  }
  func.func @transform_4(%arg0: i32) -> (i32, i32) {
    %c0_i32 = arith.constant 0 : i32
    %c0_i32_0 = arith.constant 0 : i32
    %c0_i32_1 = arith.constant 0 : i32
    return %c0_i32, %c0_i32_0 : i32, i32
  }
  func.func @transform_5(%arg0: i32) -> (i32, i32) {
    %c0_i32 = arith.constant 0 : i32
    %c0_i32_0 = arith.constant 0 : i32
    %c0_i32_1 = arith.constant 0 : i32
    return %c0_i32, %c0_i32_0 : i32, i32
  }
  func.func @transform_6(%arg0: i32) -> (i32, i32) {
    %c0_i32 = arith.constant 0 : i32
    %c0_i32_0 = arith.constant 0 : i32
    return %arg0, %c0_i32 : i32, i32
  }
}

</mosaic_0001>

<llo_original>
// kernel: probe_individual_forward.1
$region0: #{probe_individual_forward.1}
  #allocation0 [shape = 'u32[]', space=smem, size = 0x4, offset = 0x4, fixed_abs, tag = 'smem constant byte address 0x4 - core index']
  #allocation1 [shape = 'u32[144,128]{1,0:T(1,128)}', space=vmem, size = 0x12000, scoped, tag = 'internal scratch']
  %s0 = inlined_call_operand.vmem [shape: f32[8,1024], index: 0, kind: input, shape index: {}]
  %s1 = inlined_call_operand.vmem [shape: bf16[32,1024], index: 1, kind: input, shape index: {}]
  %s2 = inlined_call_operand.vmem [shape: bf16[32,128], index: 2, kind: input, shape index: {}]
  %s3 = inlined_call_operand.vmem [shape: f32[1,128], index: 3, kind: input, shape index: {}]
  %s4 = inlined_call_operand.vmem [shape: bf16[128,128], index: 4, kind: input, shape index: {}]
  %s5 = inlined_call_operand.vmem [shape: f32[1,128], index: 5, kind: input, shape index: {}]
  %s6 = inlined_call_operand.hbm [shape: f32[8,128], index: 6, kind: output, shape index: {}]
  %s7 = sld [smem:[#allocation0]]
  $region34: #{probe_individual_forward.1} parent=0
    _
  %s9 = ssub.s32 1, %s7
  %s10 = scalar_select 0, %s9, %s7
  $region1: #{probe_individual_forward.1} parent=0
    #allocation2 [shape = 'u8[4096]{0}', space=vmem, size = 0x1000, scoped, tag = 'output window, operand 0, single buffered']
    #allocation3 [shape = 's32[1]{0}', space=sflag, size = 0x4, scoped, tag = 'scoped memory for probe_individual_forward.1']
    %11 = vsyncpa [#allocation3], 0
    // Predicated region
    $region2: #{probe_individual_forward.1} parent=1 // pred_check
      _
    $region3: #{probe_individual_forward.1} parent=1 // pred_check_branch
      %13 = sbr.rel (0) target = $region5
    $region4: #{probe_individual_forward.1} parent=1 // pred_region
      _
    $region5: #{probe_individual_forward.1} parent=1 // pred_fallthru
      _
    // Predicated region
    $region6: #{probe_individual_forward.1} parent=1 // pred_check
      _
    $region7: #{probe_individual_forward.1} parent=1 // pred_check_branch
      %15 = sbr.rel (0) target = $region9
    $region8: #{probe_individual_forward.1} parent=1 // pred_region
      _
    $region9: #{probe_individual_forward.1} parent=1 // pred_fallthru
      _
    // Predicated region
    $region10: #{probe_individual_forward.1} parent=1 // pred_check
      _
    $region11: #{probe_individual_forward.1} parent=1 // pred_check_branch
      %17 = sbr.rel (0) target = $region13
    $region12: #{probe_individual_forward.1} parent=1 // pred_region
      _
    $region13: #{probe_individual_forward.1} parent=1 // pred_fallthru
      _
    // Predicated region
    $region14: #{probe_individual_forward.1} parent=1 // pred_check
      _
    $region15: #{probe_individual_forward.1} parent=1 // pred_check_branch
      %19 = sbr.rel (0) target = $region17
    $region16: #{probe_individual_forward.1} parent=1 // pred_region
      _
    $region17: #{probe_individual_forward.1} parent=1 // pred_fallthru
      _
    // Predicated region
    $region18: #{probe_individual_forward.1} parent=1 // pred_check
      _
    $region19: #{probe_individual_forward.1} parent=1 // pred_check_branch
      %21 = sbr.rel (0) target = $region21
    $region20: #{probe_individual_forward.1} parent=1 // pred_region
      _
    $region21: #{probe_individual_forward.1} parent=1 // pred_fallthru
      _
    // Predicated region
    $region22: #{probe_individual_forward.1} parent=1 // pred_check
      _
    $region23: #{probe_individual_forward.1} parent=1 // pred_check_branch
      %23 = sbr.rel (0) target = $region25
    $region24: #{probe_individual_forward.1} parent=1 // pred_region
      _
    $region25: #{probe_individual_forward.1} parent=1 // pred_fallthru
      _
    %v25 = vld [vmem:[%s0] sm:$0xff]
    %v26 = vld [vmem:[%s0 + $0x8] sm:$0xff]
    %v27 = vld [vmem:[%s0 + $0x10] sm:$0xff]
    %v28 = vld [vmem:[%s0 + $0x18] sm:$0xff]
    %v29 = vld [vmem:[%s0 + $0x20] sm:$0xff]
    %v30 = vld [vmem:[%s0 + $0x28] sm:$0xff]
    %v31 = vld [vmem:[%s0 + $0x30] sm:$0xff]
    %v32 = vld [vmem:[%s0 + $0x38] sm:$0xff]
    %v33 = vpack.c.bf16 %v25, %v25
    %v34 = vpack.c.bf16 %v26, %v26
    %v35 = vpack.c.bf16 %v27, %v27
    %v36 = vpack.c.bf16 %v28, %v28
    %v37 = vpack.c.bf16 %v29, %v29
    %v38 = vpack.c.bf16 %v30, %v30
    %v39 = vpack.c.bf16 %v31, %v31
    %v40 = vpack.c.bf16 %v32, %v32
    %v41 = vld [vmem:[%s1] sm:$0xff]
    %v42 = vld [vmem:[%s1 + $0x8] sm:$0xff]
    %v43 = vld [vmem:[%s1 + $0x10] sm:$0xff]
    %v44 = vld [vmem:[%s1 + $0x18] sm:$0xff]
    %v45 = vld [vmem:[%s1 + $0x20] sm:$0xff]
    %v46 = vld [vmem:[%s1 + $0x28] sm:$0xff]
    %v47 = vld [vmem:[%s1 + $0x30] sm:$0xff]
    %v48 = vld [vmem:[%s1 + $0x38] sm:$0xff]
    %v49 = vld [vmem:[%s1 + $0x40] sm:$0xff]
    %v50 = vld [vmem:[%s1 + $0x48] sm:$0xff]
    %v51 = vld [vmem:[%s1 + $0x50] sm:$0xff]
    %v52 = vld [vmem:[%s1 + $0x58] sm:$0xff]
    %v53 = vld [vmem:[%s1 + $0x60] sm:$0xff]
    %v54 = vld [vmem:[%s1 + $0x68] sm:$0xff]
    %v55 = vld [vmem:[%s1 + $0x70] sm:$0xff]
    %v56 = vld [vmem:[%s1 + $0x78] sm:$0xff]
    %v73 = vunpack.c.l.b16 %v41
    %v74 = vunpack.c.h.b16 %v41
    %v75 = vunpack.c.l.b16 %v42
    %v76 = vunpack.c.h.b16 %v42
    %v77 = vunpack.c.l.b16 %v43
    %v78 = vunpack.c.h.b16 %v43
    %v79 = vunpack.c.l.b16 %v44
    %v80 = vunpack.c.h.b16 %v44
    %v81 = vunpack.c.l.b16 %v45
    %v82 = vunpack.c.h.b16 %v45
    %v83 = vunpack.c.l.b16 %v46
    %v84 = vunpack.c.h.b16 %v46
    %v85 = vunpack.c.l.b16 %v47
    %v86 = vunpack.c.h.b16 %v47
    %v87 = vunpack.c.l.b16 %v48
    %v88 = vunpack.c.h.b16 %v48
    %v89 = vunpack.c.l.b16 %v49
    %v90 = vunpack.c.h.b16 %v49
    %v91 = vunpack.c.l.b16 %v50
    %v92 = vunpack.c.h.b16 %v50
    %v93 = vunpack.c.l.b16 %v51
    %v94 = vunpack.c.h.b16 %v51
    %v95 = vunpack.c.l.b16 %v52
    %v96 = vunpack.c.h.b16 %v52
    %v97 = vunpack.c.l.b16 %v53
    %v98 = vunpack.c.h.b16 %v53
    %v99 = vunpack.c.l.b16 %v54
    %v100 = vunpack.c.h.b16 %v54
    %v101 = vunpack.c.l.b16 %v55
    %v102 = vunpack.c.h.b16 %v55
    %v103 = vunpack.c.l.b16 %v56
    %v104 = vunpack.c.h.b16 %v56
    %v105 = vpack.c.b16 %v81, %v73
    %v106 = vpack.c.b16 %v82, %v74
    %v107 = vpack.c.b16 %v83, %v75
    %v108 = vpack.c.b16 %v84, %v76
    %v109 = vpack.c.b16 %v85, %v77
    %v110 = vpack.c.b16 %v86, %v78
    %v111 = vpack.c.b16 %v87, %v79
    %v112 = vpack.c.b16 %v88, %v80
    %v113 = vpack.c.b16 %v97, %v89
    %v114 = vpack.c.b16 %v98, %v90
    %v115 = vpack.c.b16 %v99, %v91
    %v116 = vpack.c.b16 %v100, %v92
    %v117 = vpack.c.b16 %v101, %v93
    %v118 = vpack.c.b16 %v102, %v94
    %v119 = vpack.c.b16 %v103, %v95
    %v120 = vpack.c.b16 %v104, %v96
    %137 = vmatprep.subr.bf16.mxu0 0
    %138 = vmatpush1.bf16.xpose.msra.mxu0 0
    %139 = vmatprep.subr.bf16.mxu0 0
    %140 = vmatpush1.bf16.xpose.msra.mxu0 0
    %141 = vmatprep.subr.bf16.mxu0 0
    %142 = vmatpush1.bf16.xpose.msra.mxu0 0
    %143 = vmatprep.subr.bf16.mxu0 0
    %144 = vmatpush1.bf16.xpose.msra.mxu0 0
    %145 = vmatprep.subr.bf16.mxu0 0
    %146 = vmatpush1.bf16.xpose.msra.mxu0 0
    %147 = vmatprep.subr.bf16.mxu0 0
    %148 = vmatpush1.bf16.xpose.msra.mxu0 0
    %149 = vmatprep.subr.bf16.mxu0 %v114
    %150 = vmatpush1.bf16.xpose.msra.mxu0 %v113
    %151 = vmatprep.subr.bf16.mxu0 %v106
    %152 = vmatpush1.bf16.xpose.msra.mxu0 %v105
    %153 = vmatprep.subr.bf16.mxu0 0
    %154 = vmatpush2.bf16.xpose.msra.mxu0 0
    %155 = vmatprep.subr.bf16.mxu0 0
    %156 = vmatpush2.bf16.xpose.msra.mxu0 0
    %157 = vmatprep.subr.bf16.mxu0 0
    %158 = vmatpush2.bf16.xpose.msra.mxu0 0
    %159 = vmatprep.subr.bf16.mxu0 0
    %160 = vmatpush2.bf16.xpose.msra.mxu0 0
    %161 = vmatprep.subr.bf16.mxu0 0
    %162 = vmatpush2.bf16.xpose.msra.mxu0 0
    %163 = vmatprep.subr.bf16.mxu0 0
    %164 = vmatpush2.bf16.xpose.msra.mxu0 0
    %165 = vmatprep.subr.bf16.mxu0 0
    %166 = vmatpush2.bf16.xpose.msra.mxu0 0
    %167 = vmatprep.subr.bf16.mxu0 0
    %168 = vmatpush2.bf16.xpose.msra.mxu0 0
    %169 = vmatprep.mubr.bf16.mxu0 %v34
    %170 = vmatmul.mubr.bf16.gmra.mxu0 %v33
    %v171 = vpop.f32.mrf.mxu0
    %v172 = vadd.f32 0.0, %v171
    %v173 = vpop.f32.mrf.mxu0
    %v174 = vpop.f32.mrf.mxu0
    %v175 = vpop.f32.mrf.mxu0
    %176 = vdwg.mxu0
    %177 = vmatprep.subr.bf16.mxu0 0
    %178 = vmatpush1.bf16.xpose.msra.mxu0 0
    %179 = vmatprep.subr.bf16.mxu0 0
    %180 = vmatpush1.bf16.xpose.msra.mxu0 0
    %181 = vmatprep.subr.bf16.mxu0 0
    %182 = vmatpush1.bf16.xpose.msra.mxu0 0
    %183 = vmatprep.subr.bf16.mxu0 0
    %184 = vmatpush1.bf16.xpose.msra.mxu0 0
    %185 = vmatprep.subr.bf16.mxu0 0
    %186 = vmatpush1.bf16.xpose.msra.mxu0 0
    %187 = vmatprep.subr.bf16.mxu0 0
    %188 = vmatpush1.bf16.xpose.msra.mxu0 0
    %189 = vmatprep.subr.bf16.mxu0 %v116
    %190 = vmatpush1.bf16.xpose.msra.mxu0 %v115
    %191 = vmatprep.subr.bf16.mxu0 %v108
    %192 = vmatpush1.bf16.xpose.msra.mxu0 %v107
    %193 = vmatprep.subr.bf16.mxu0 0
    %194 = vmatpush2.bf16.xpose.msra.mxu0 0
    %195 = vmatprep.subr.bf16.mxu0 0
    %196 = vmatpush2.bf16.xpose.msra.mxu0 0
    %197 = vmatprep.subr.bf16.mxu0 0
    %198 = vmatpush2.bf16.xpose.msra.mxu0 0
    %199 = vmatprep.subr.bf16.mxu0 0
    %200 = vmatpush2.bf16.xpose.msra.mxu0 0
    %201 = vmatprep.subr.bf16.mxu0 0
    %202 = vmatpush2.bf16.xpose.msra.mxu0 0
    %203 = vmatprep.subr.bf16.mxu0 0
    %204 = vmatpush2.bf16.xpose.msra.mxu0 0
    %205 = vmatprep.subr.bf16.mxu0 0
    %206 = vmatpush2.bf16.xpose.msra.mxu0 0
    %207 = vmatprep.subr.bf16.mxu0 0
    %208 = vmatpush2.bf16.xpose.msra.mxu0 0
    %209 = vmatprep.mubr.bf16.mxu0 %v36
    %210 = vmatmul.mubr.bf16.gmra.mxu0 %v35
    %v211 = vpop.f32.mrf.mxu0
    %v212 = vadd.f32 %v172, %v211
    %v213 = vpop.f32.mrf.mxu0
    %v214 = vpop.f32.mrf.mxu0
    %v215 = vpop.f32.mrf.mxu0
    %216 = vdwg.mxu0
    %217 = vmatprep.subr.bf16.mxu0 0
    %218 = vmatpush1.bf16.xpose.msra.mxu0 0
    %219 = vmatprep.subr.bf16.mxu0 0
    %220 = vmatpush1.bf16.xpose.msra.mxu0 0
    %221 = vmatprep.subr.bf16.mxu0 0
    %222 = vmatpush1.bf16.xpose.msra.mxu0 0
    %223 = vmatprep.subr.bf16.mxu0 0
    %224 = vmatpush1.bf16.xpose.msra.mxu0 0
    %225 = vmatprep.subr.bf16.mxu0 0
    %226 = vmatpush1.bf16.xpose.msra.mxu0 0
    %227 = vmatprep.subr.bf16.mxu0 0
    %228 = vmatpush1.bf16.xpose.msra.mxu0 0
    %229 = vmatprep.subr.bf16.mxu0 %v118
    %230 = vmatpush1.bf16.xpose.msra.mxu0 %v117
    %231 = vmatprep.subr.bf16.mxu0 %v110
    %232 = vmatpush1.bf16.xpose.msra.mxu0 %v109
    %233 = vmatprep.subr.bf16.mxu0 0
    %234 = vmatpush2.bf16.xpose.msra.mxu0 0
    %235 = vmatprep.subr.bf16.mxu0 0
    %236 = vmatpush2.bf16.xpose.msra.mxu0 0
    %237 = vmatprep.subr.bf16.mxu0 0
    %238 = vmatpush2.bf16.xpose.msra.mxu0 0
    %239 = vmatprep.subr.bf16.mxu0 0
    %240 = vmatpush2.bf16.xpose.msra.mxu0 0
    %241 = vmatprep.subr.bf16.mxu0 0
    %242 = vmatpush2.bf16.xpose.msra.mxu0 0
    %243 = vmatprep.subr.bf16.mxu0 0
    %244 = vmatpush2.bf16.xpose.msra.mxu0 0
    %245 = vmatprep.subr.bf16.mxu0 0
    %246 = vmatpush2.bf16.xpose.msra.mxu0 0
    %247 = vmatprep.subr.bf16.mxu0 0
    %248 = vmatpush2.bf16.xpose.msra.mxu0 0
    %249 = vmatprep.mubr.bf16.mxu0 %v38
    %250 = vmatmul.mubr.bf16.gmra.mxu0 %v37
    %v251 = vpop.f32.mrf.mxu0
    %v252 = vadd.f32 %v212, %v251
    %v253 = vpop.f32.mrf.mxu0
    %v254 = vpop.f32.mrf.mxu0
    %v255 = vpop.f32.mrf.mxu0
    %256 = vdwg.mxu0
    %257 = vmatprep.subr.bf16.mxu0 0
    %258 = vmatpush1.bf16.xpose.msra.mxu0 0
    %259 = vmatprep.subr.bf16.mxu0 0
    %260 = vmatpush1.bf16.xpose.msra.mxu0 0
    %261 = vmatprep.subr.bf16.mxu0 0
    %262 = vmatpush1.bf16.xpose.msra.mxu0 0
    %263 = vmatprep.subr.bf16.mxu0 0
    %264 = vmatpush1.bf16.xpose.msra.mxu0 0
    %265 = vmatprep.subr.bf16.mxu0 0
    %266 = vmatpush1.bf16.xpose.msra.mxu0 0
    %267 = vmatprep.subr.bf16.mxu0 0
    %268 = vmatpush1.bf16.xpose.msra.mxu0 0
    %269 = vmatprep.subr.bf16.mxu0 %v120
    %270 = vmatpush1.bf16.xpose.msra.mxu0 %v119
    %271 = vmatprep.subr.bf16.mxu0 %v112
    %272 = vmatpush1.bf16.xpose.msra.mxu0 %v111
    %273 = vmatprep.subr.bf16.mxu0 0
    %274 = vmatpush2.bf16.xpose.msra.mxu0 0
    %275 = vmatprep.subr.bf16.mxu0 0
    %276 = vmatpush2.bf16.xpose.msra.mxu0 0
    %277 = vmatprep.subr.bf16.mxu0 0
    %278 = vmatpush2.bf16.xpose.msra.mxu0 0
    %279 = vmatprep.subr.bf16.mxu0 0
    %280 = vmatpush2.bf16.xpose.msra.mxu0 0
    %281 = vmatprep.subr.bf16.mxu0 0
    %282 = vmatpush2.bf16.xpose.msra.mxu0 0
    %283 = vmatprep.subr.bf16.mxu0 0
    %284 = vmatpush2.bf16.xpose.msra.mxu0 0
    %285 = vmatprep.subr.bf16.mxu0 0
    %286 = vmatpush2.bf16.xpose.msra.mxu0 0
    %287 = vmatprep.subr.bf16.mxu0 0
    %288 = vmatpush2.bf16.xpose.msra.mxu0 0
    %289 = vmatprep.mubr.bf16.mxu0 %v40
    %290 = vmatmul.mubr.bf16.gmra.mxu0 %v39
    %v291 = vpop.f32.mrf.mxu0
    %v292 = vadd.f32 %v252, %v291
    %v293 = vpop.f32.mrf.mxu0
    %v294 = vpop.f32.mrf.mxu0
    %v295 = vpop.f32.mrf.mxu0
    %296 = vdwg.mxu0
    %v297 = vpack.c.bf16 %v292, %v292
    %v298 = vld [vmem:[%s2] sm:$0xf]
    %v299 = vld [vmem:[%s2 + $0x4] sm:$0xf]
    %v300 = vld [vmem:[%s2 + $0x8] sm:$0xf]
    %v301 = vld [vmem:[%s2 + $0xc] sm:$0xf]
    %v302 = vld [vmem:[%s3] sm:$0x1]
    %v304 = vlaneseq
    %v305 = vshrl.u32 %v304, 7
    %v306 = vsub.s32 0, %v305
    %v307 = vrot.slane %v302, %v306
    %v313 = vunpack.c.l.b16 %v298
    %v314 = vunpack.c.l.b16 %v299
    %v315 = vunpack.c.l.b16 %v300
    %v316 = vunpack.c.l.b16 %v301
    %v317 = vpack.c.b16 %v314, %v313
    %v318 = vpack.c.b16 %v316, %v315
    %vm321 = vcmask 261120
    %v323 = vsel %vm321, %v297, 0
    %325 = vmatprep.subr.bf16.mxu0 0
    %326 = vmatpush1.bf16.msra.mxu0 0
    %327 = vmatprep.subr.bf16.mxu0 0
    %328 = vmatpush1.bf16.msra.mxu0 0
    %329 = vmatprep.subr.bf16.mxu0 0
    %330 = vmatpush1.bf16.msra.mxu0 0
    %331 = vmatprep.subr.bf16.mxu0 0
    %332 = vmatpush1.bf16.msra.mxu0 0
    %333 = vmatprep.subr.bf16.mxu0 0
    %334 = vmatpush1.bf16.msra.mxu0 0
    %335 = vmatprep.subr.bf16.mxu0 0
    %336 = vmatpush1.bf16.msra.mxu0 0
    %337 = vmatprep.subr.bf16.mxu0 0
    %338 = vmatpush1.bf16.msra.mxu0 %v318
    %339 = vmatprep.subr.bf16.mxu0 0
    %340 = vmatpush1.bf16.msra.mxu0 %v317
    %341 = vmatprep.subr.bf16.mxu0 0
    %342 = vmatpush2.bf16.msra.mxu0 0
    %343 = vmatprep.subr.bf16.mxu0 0
    %344 = vmatpush2.bf16.msra.mxu0 0
    %345 = vmatprep.subr.bf16.mxu0 0
    %346 = vmatpush2.bf16.msra.mxu0 0
    %347 = vmatprep.subr.bf16.mxu0 0
    %348 = vmatpush2.bf16.msra.mxu0 0
    %349 = vmatprep.subr.bf16.mxu0 0
    %350 = vmatpush2.bf16.msra.mxu0 0
    %351 = vmatprep.subr.bf16.mxu0 0
    %352 = vmatpush2.bf16.msra.mxu0 0
    %353 = vmatprep.subr.bf16.mxu0 0
    %354 = vmatpush2.bf16.msra.mxu0 0
    %355 = vmatprep.subr.bf16.mxu0 0
    %356 = vmatpush2.bf16.msra.mxu0 0
    %357 = vmatprep.mubr.bf16.mxu0 0
    %358 = vmatmul.mubr.bf16.gmra.mxu0 %v323
    %v359 = vpop.f32.mrf.mxu0
    %v360 = vadd.f32 %v307, %v359
    %v361 = vpop.f32.mrf.mxu0
    %v362 = vpop.f32.mrf.mxu0
    %v363 = vpop.f32.mrf.mxu0
    %364 = vdwg.mxu0
    %v365 = vmax.f32 %v360, 0.0
    %v366 = vpack.c.bf16 %v365, %v365
    %v367 = vld [vmem:[%s4] sm:$0xf]
    %v368 = vld [vmem:[%s4 + $0x4] sm:$0xf]
    %v369 = vld [vmem:[%s4 + $0x8] sm:$0xf]
    %v370 = vld [vmem:[%s4 + $0xc] sm:$0xf]
    %v371 = vld [vmem:[%s4 + $0x10] sm:$0xf]
    %v372 = vld [vmem:[%s4 + $0x14] sm:$0xf]
    %v373 = vld [vmem:[%s4 + $0x18] sm:$0xf]
    %v374 = vld [vmem:[%s4 + $0x1c] sm:$0xf]
    %v375 = vld [vmem:[%s4 + $0x20] sm:$0xf]
    %v376 = vld [vmem:[%s4 + $0x24] sm:$0xf]
    %v377 = vld [vmem:[%s4 + $0x28] sm:$0xf]
    %v378 = vld [vmem:[%s4 + $0x2c] sm:$0xf]
    %v379 = vld [vmem:[%s4 + $0x30] sm:$0xf]
    %v380 = vld [vmem:[%s4 + $0x34] sm:$0xf]
    %v381 = vld [vmem:[%s4 + $0x38] sm:$0xf]
    %v382 = vld [vmem:[%s4 + $0x3c] sm:$0xf]
    %v383 = vld [vmem:[%s5] sm:$0x1]
    %v385 = vlaneseq
    %v386 = vshrl.u32 %v385, 7
    %v387 = vsub.s32 0, %v386
    %v388 = vrot.slane %v383, %v387
    %v406 = vunpack.c.l.b16 %v367
    %v407 = vunpack.c.l.b16 %v368
    %v408 = vunpack.c.l.b16 %v369
    %v409 = vunpack.c.l.b16 %v370
    %v410 = vunpack.c.l.b16 %v371
    %v411 = vunpack.c.l.b16 %v372
    %v412 = vunpack.c.l.b16 %v373
    %v413 = vunpack.c.l.b16 %v374
    %v414 = vunpack.c.l.b16 %v375
    %v415 = vunpack.c.l.b16 %v376
    %v416 = vunpack.c.l.b16 %v377
    %v417 = vunpack.c.l.b16 %v378
    %v418 = vunpack.c.l.b16 %v379
    %v419 = vunpack.c.l.b16 %v380
    %v420 = vunpack.c.l.b16 %v381
    %v421 = vunpack.c.l.b16 %v382
    %v422 = vpack.c.b16 %v407, %v406
    %v423 = vpack.c.b16 %v409, %v408
    %v424 = vpack.c.b16 %v411, %v410
    %v425 = vpack.c.b16 %v413, %v412
    %v426 = vpack.c.b16 %v415, %v414
    %v427 = vpack.c.b16 %v417, %v416
    %v428 = vpack.c.b16 %v419, %v418
    %v429 = vpack.c.b16 %v421, %v420
    %438 = vmatprep.subr.bf16.mxu0 0
    %439 = vmatpush1.bf16.msra.mxu0 %v429
    %440 = vmatprep.subr.bf16.mxu0 0
    %441 = vmatpush1.bf16.msra.mxu0 %v428
    %442 = vmatprep.subr.bf16.mxu0 0
    %443 = vmatpush1.bf16.msra.mxu0 %v427
    %444 = vmatprep.subr.bf16.mxu0 0
    %445 = vmatpush1.bf16.msra.mxu0 %v426
    %446 = vmatprep.subr.bf16.mxu0 0
    %447 = vmatpush1.bf16.msra.mxu0 %v425
    %448 = vmatprep.subr.bf16.mxu0 0
    %449 = vmatpush1.bf16.msra.mxu0 %v424
    %450 = vmatprep.subr.bf16.mxu0 0
    %451 = vmatpush1.bf16.msra.mxu0 %v423
    %452 = vmatprep.subr.bf16.mxu0 0
    %453 = vmatpush1.bf16.msra.mxu0 %v422
    %454 = vmatprep.subr.bf16.mxu0 0
    %455 = vmatpush2.bf16.msra.mxu0 0
    %456 = vmatprep.subr.bf16.mxu0 0
    %457 = vmatpush2.bf16.msra.mxu0 0
    %458 = vmatprep.subr.bf16.mxu0 0
    %459 = vmatpush2.bf16.msra.mxu0 0
    %460 = vmatprep.subr.bf16.mxu0 0
    %461 = vmatpush2.bf16.msra.mxu0 0
    %462 = vmatprep.subr.bf16.mxu0 0
    %463 = vmatpush2.bf16.msra.mxu0 0
    %464 = vmatprep.subr.bf16.mxu0 0
    %465 = vmatpush2.bf16.msra.mxu0 0
    %466 = vmatprep.subr.bf16.mxu0 0
    %467 = vmatpush2.bf16.msra.mxu0 0
    %468 = vmatprep.subr.bf16.mxu0 0
    %469 = vmatpush2.bf16.msra.mxu0 0
    %470 = vmatprep.mubr.bf16.mxu0 0
    %471 = vmatmul.mubr.bf16.gmra.mxu0 %v366
    %v472 = vpop.f32.mrf.mxu0
    %v473 = vadd.f32 %v388, %v472
    %v474 = vpop.f32.mrf.mxu0
    %v475 = vpop.f32.mrf.mxu0
    %v476 = vpop.f32.mrf.mxu0
    %477 = vdwg.mxu0
    %478 = vst [vmem:[#allocation2] sm:$0xff] %v473
    // Predicated region
    $region26: #{probe_individual_forward.1} parent=1 // pred_check
      _
    $region27: #{probe_individual_forward.1} parent=1 // pred_check_branch
      %480 = sbr.rel (0) target = $region29
    $region28: #{probe_individual_forward.1} parent=1 // pred_region
      %s482 = ssub.s32 128, 128
      %483 = vsyncadd [#allocation3], %s482
      %s485 = sshll.u32 [#allocation2], 4
      %s486 = int_to_ptr.vmem [resolvable:$true] %s485
      %488 = dma.vmem_to_hbm [thread:$0]  %s486, 128, %s6, [#allocation3]
    $region29: #{probe_individual_forward.1} parent=1 // pred_fallthru
      _
    // Predicated region
    $region30: #{probe_individual_forward.1} parent=1 // pred_check
      _
    $region31: #{probe_individual_forward.1} parent=1 // pred_check_branch
      %490 = sbr.rel (0) target = $region33
    $region32: #{probe_individual_forward.1} parent=1 // pred_region
      %491 = dma.done [#allocation3], 128
    $region33: #{probe_individual_forward.1} parent=1 // pred_fallthru
      _
    %492 = vsyncpa [#allocation3], 1

</llo_original>
